<compile_context>
chip_gen: v7x
topology: tpu7x:2x2x1
jax: 0.10.0
libtpu: 0.0.40
codegen_flags: <defaults>
</compile_context>

<pallas_src>
import numpy as np
import jax
import jax.numpy as jnp
from jax import lax
from jax.experimental import pallas as pl
from jax.experimental.pallas import tpu as pltpu


def _disc_kernel(x_ref, w_ref, wlin_ref, out_ref, acc_ref):
    # x_ref   : (2, tb, T, H)   stacked [h_ori, h_tsf] batch tile, bf16
    # w_ref   : (kmax, H, Npad) fused conv weights (taps >= k_sz zeroed), bf16
    # wlin_ref: (1, Npad)       linear-head weight, lane-padded with zeros, f32
    # out_ref : (2, tb, 128)    per-row logits (minus fused bias), lane-broadcast
    # acc_ref : (2*tb*T, Npad)  f32 conv accumulator (VMEM scratch)
    two, tb, T, H = x_ref.shape
    kmax = w_ref.shape[0]
    npad = w_ref.shape[2]
    M = two * tb * T

    # MXU operand: built once, reused by every tap (never shifted / copied).
    x2 = x_ref[...].reshape(M, H)

    # Flattened-row time index (row r <-> t = r % T): masks the rows of a rolled
    # tap output that correspond to the conv's right zero-padding (this also
    # covers rows that wrapped across batch boundaries in the flattened roll).
    t_idx = lax.broadcasted_iota(jnp.int32, (two * tb, T, npad), 1).reshape(M, npad)

    # Tap 0: no shift.
    acc_ref[...] = jnp.dot(x2, w_ref[0], preferred_element_type=jnp.float32)

    # Taps 1..kmax-1:   conv[t] += x[t+s] @ W_s
    #                          ==  roll(x @ W_s, -s, rows) masked to t < T - s.
    # The shift runs on the XLU and touches only the f32 tap output, so the bf16
    # MXU operand stays stationary in VMEM (no per-tap relayout copies of x).
    for s in range(1, kmax):
        y = jnp.dot(x2, w_ref[s], preferred_element_type=jnp.float32)    # (M, Npad)
        y = pltpu.roll(y, shift=M - s, axis=0)        # == jnp.roll(y, -s, axis=0)
        acc_ref[...] += jnp.where(t_idx < (T - s), y, 0.0)

    # Max over time (exactly PyTorch's max over the T retained conv columns),
    # then the fused linear head as a VPU multiply + lane reduce.  Conv bias and
    # linear bias are folded into one scalar added by the wrapper (exact).
    pooled = jnp.max(acc_ref[...].reshape(two, tb, T, npad), axis=2)     # (2, tb, Npad)
    logits = jnp.sum(pooled * wlin_ref[...], axis=-1, keepdims=True)     # (2, tb, 1)
    out_ref[...] = jnp.broadcast_to(logits, (two, tb, 128))              # lane-dense store


def shared_cnn_discriminator(disc, h_ori, h_tsf, params, *, block_b=8):
    """SharedCNNDiscriminator.forward -> (loss_d, loss_g).

    `ones` / `zeros` targets are implicit (all-1 / all-0), matching the module.
    """
    p = params['disc0'] if disc == '0' else params['disc1']
    W, bconv = p['W'], p['b']                     # (nS, kmax, H, F), (nS, 1, F)
    nS, kmax, H, F = W.shape
    B, T, Hx = h_ori.shape
    assert Hx == H and h_tsf.shape == h_ori.shape

    nfeat = nS * F
    npad = max(128, ((nfeat + 127) // 128) * 128)     # lane-dense feature width

    # Fuse conv weights across filter sizes: wf[s, h, si*F+f] = W[si, s, h, f]
    # (taps s >= k_sz are already zero, so shorter filters are exact).
    wf = jnp.transpose(W, (1, 2, 0, 3)).reshape(kmax, H, nfeat)
    wf = jnp.pad(wf, ((0, 0), (0, 0), (0, npad - nfeat))).astype(jnp.bfloat16)

    wlin_flat = params['wlin'].reshape(nfeat).astype(jnp.float32)
    wlin = jnp.pad(wlin_flat, (0, npad - nfeat)).reshape(1, npad)

    # Conv bias is constant over time (max(conv + b) == max(conv) + b) and
    # dropout is identity in eval mode, so conv bias + linear bias fold into one
    # scalar added to the logits outside the kernel (exact).
    # TODO(synk): nn.Dropout is applied as identity (eval-mode); PyTorch
    # training RNG dropout is not reproduced.
    blin_eff = (params['blin'].astype(jnp.float32)[0]
                + jnp.dot(bconv.reshape(nfeat).astype(jnp.float32), wlin_flat))

    # ---- batch tiling --------------------------------------------------------
    # tb multiple of 8 (clean sublane tiling of the lane-dense logit block);
    # shrink tb if the f32 accumulator + tap temporaries would not fit v7x's
    # smaller VMEM comfortably.  (For peak v6e/v7x MXU utilisation pick tb*T so
    # 2*tb*T is a multiple of 256; Npad is already a multiple of 128.)
    tb = max(8, (block_b // 8) * 8)
    f32_budget = 12 * 1024 * 1024        # acc + per-tap temporaries, bytes
    while tb > 8 and 5 * (2 * tb * T) * npad * 4 > f32_budget:
        tb -= 8
    # TODO(synk): for very long T even tb=8 can exceed this budget; chunk the
    # time axis in-kernel with a running max instead of shrinking tb further.

    # Pad B to a multiple of tb and to >= 2 grid steps so both v7x TensorCores
    # get work and the input DMA double-buffers.  Padded rows are sliced off
    # before the BCE mean, so the losses stay unbiased.
    bpad = max(2 * tb, ((B + tb - 1) // tb) * tb)
    grid = (bpad // tb,)

    xs = jnp.stack([h_ori, h_tsf]).astype(jnp.bfloat16)       # (2, B, T, H)
    if bpad != B:
        xs = jnp.pad(xs, ((0, 0), (0, bpad - B), (0, 0), (0, 0)))

    M = 2 * tb * T
    flops = 2 * kmax * (2 * bpad * T) * H * npad + 4 * bpad * npad
    bytes_accessed = (xs.size * 2 + wf.size * 2 + wlin.size * 4
                      + 2 * bpad * 128 * 4)

    out = pl.pallas_call(
        _disc_kernel,
        out_shape=jax.ShapeDtypeStruct((2, bpad, 128), jnp.float32),
        grid_spec=pltpu.PrefetchScalarGridSpec(
            num_scalar_prefetch=0,
            grid=grid,
            in_specs=[
                pl.BlockSpec((2, tb, T, H), lambda i: (0, i, 0, 0)),
                # Constant block index -> fetched once, never re-DMAed across
                # steps (pl.Buffered(1) could reclaim the spare weight buffer if
                # VMEM ever became tight; left at the default here).
                pl.BlockSpec((kmax, H, npad), lambda i: (0, 0, 0)),
                pl.BlockSpec((1, npad), lambda i: (0, 0)),
            ],
            out_specs=pl.BlockSpec((2, tb, 128), lambda i: (0, i, 0)),
            scratch_shapes=[pltpu.VMEM((M, npad), jnp.float32)],
        ),
        compiler_params=pltpu.CompilerParams(
            dimension_semantics=("parallel",),        # 2-TC sharding on v7x
            vmem_limit_bytes=48 * 1024 * 1024),
        cost_estimate=pl.CostEstimate(flops=flops, transcendentals=0,
                                      bytes_accessed=bytes_accessed),
    )(xs, wf, wlin)

    logits = out[:, :B, 0] + blin_eff                 # (2, B): [ori, tsf]
    logits_ori, logits_tsf = logits[0], logits[1]

    def bce_with_logits(x, y):
        # matches torch.nn.functional.binary_cross_entropy_with_logits (mean)
        return jnp.mean(jnp.maximum(x, 0.0) - x * y + jnp.log1p(jnp.exp(-jnp.abs(x))))

    loss_d = bce_with_logits(logits_ori, 1.0) + bce_with_logits(logits_tsf, 0.0)
    loss_g = bce_with_logits(logits_tsf, 1.0)
    return loss_d, loss_g


# ----------------------- pure-JAX (XLA conv) reference -----------------------
def _reference(disc, h_ori, h_tsf, params, filter_sizes, hdims):
    p = params['disc0'] if disc == '0' else params['disc1']

    def feats(x):  # x: (B, T, H), replicate PyTorch NCHW path exactly (fp32)
        xin = jnp.transpose(x.astype(jnp.float32), (0, 2, 1))[:, None, :, :]  # (B,1,H,T)
        outs = []
        for si, ksz in enumerate(filter_sizes):
            wp = p['W'][si, :ksz]                                # (ksz,H,F)
            w = jnp.transpose(wp, (2, 1, 0))[:, None, :, :]      # (F,1,H,ksz) OIHW
            conv = jax.lax.conv_general_dilated(
                xin, w, window_strides=(hdims, 1),
                padding=((0, 0), (ksz - 1, ksz - 1)),
                dimension_numbers=('NCHW', 'OIHW', 'NCHW'),
                precision=jax.lax.Precision.HIGHEST)
            conv = conv + p['b'][si].reshape(1, -1, 1, 1)
            conv = jnp.squeeze(conv, axis=2)[:, :, ksz - 1:]     # (B,F,T)
            outs.append(jnp.max(conv, axis=2))
        return jnp.concatenate(outs, axis=-1)

    f_ori, f_tsf = feats(h_ori), feats(h_tsf)
    lo = f_ori @ params['wlin'] + params['blin'][0]
    lt = f_tsf @ params['wlin'] + params['blin'][0]

    def bce(x, y):
        return jnp.mean(jnp.maximum(x, 0.0) - x * y + jnp.log1p(jnp.exp(-jnp.abs(x))))

    return bce(lo, 1.0) + bce(lt, 0.0), bce(lt, 1.0)


if __name__ == "__main__":
    # Small synthetic config (args.filter_sizes, args.n_filters, hdims)
    B, T, H = 2, 8, 32
    filter_sizes = (2, 3)
    n_filters = 8
    nS, kmax = len(filter_sizes), max(filter_sizes)

    key = jax.random.PRNGKey(0)
    k_in0, k_in1, k_d0, k_d1, k_lw, k_lb = jax.random.split(key, 6)

    def make_disc_params(k):
        kw, kb = jax.random.split(k)
        W = jnp.zeros((nS, kmax, H, n_filters), jnp.float32)
        wkeys = jax.random.split(kw, nS)
        for si, ksz in enumerate(filter_sizes):
            # PyTorch Conv2d weight shape: (F, 1, H, ksz)
            w = jax.random.normal(wkeys[si], (n_filters, 1, H, ksz), jnp.float32) * 0.1
            wp = jnp.transpose(w[:, 0], (2, 1, 0))                # (ksz, H, F)
            wp = jnp.pad(wp, ((0, kmax - ksz), (0, 0), (0, 0)))   # zero unused taps
            W = W.at[si].set(wp)
        bias = jax.random.normal(kb, (nS, 1, n_filters), jnp.float32) * 0.1
        return {'W': W, 'b': bias}

    params = {
        'disc0': make_disc_params(k_d0),
        'disc1': make_disc_params(k_d1),
        # PyTorch Linear: weight (1, nS*F), bias (1); pass transposed weight
        'wlin': (jax.random.normal(k_lw, (1, nS * n_filters), jnp.float32) * 0.1).T,
        'blin': jax.random.normal(k_lb, (1,), jnp.float32) * 0.1,
    }

    # Inputs kept in bf16 end-to-end (halves HBM traffic; MXU is bf16-native,
    # accumulation stays fp32 in-kernel).
    h_ori = jax.random.normal(k_in0, (B, T, H), jnp.float32).astype(jnp.bfloat16)
    h_tsf = jax.random.normal(k_in1, (B, T, H), jnp.float32).astype(jnp.bfloat16)

    loss_d, loss_g = shared_cnn_discriminator('0', h_ori, h_tsf, params)
    jax.block_until_ready((loss_d, loss_g))

    ref_d, ref_g = _reference('0', h_ori, h_tsf, params, filter_sizes, H)
    np.testing.assert_allclose(np.asarray(loss_d), np.asarray(ref_d), rtol=3e-2, atol=1e-2)
    np.testing.assert_allclose(np.asarray(loss_g), np.asarray(ref_g), rtol=3e-2, atol=1e-2)

    # also exercise the '1' (discriminator1) branch
    loss_d1, loss_g1 = shared_cnn_discriminator('1', h_ori, h_tsf, params)
    jax.block_until_ready((loss_d1, loss_g1))
    ref_d1, ref_g1 = _reference('1', h_ori, h_tsf, params, filter_sizes, H)
    np.testing.assert_allclose(np.asarray(loss_d1), np.asarray(ref_d1), rtol=3e-2, atol=1e-2)
    np.testing.assert_allclose(np.asarray(loss_g1), np.asarray(ref_g1), rtol=3e-2, atol=1e-2)

    print("KERNEL_OK")
</pallas_src>

<mosaic_0001>
module attributes {stable_mosaic.version = 11 : i64} {
  func.func @_disc_kernel(%arg0: i32, %arg1: memref<2x8x8x32xbf16, #tpu.memory_space<vmem>>, %arg2: memref<3x32x128xbf16, #tpu.memory_space<vmem>>, %arg3: memref<1x128xf32, #tpu.memory_space<vmem>>, %arg4: memref<2x8x128xf32, #tpu.memory_space<vmem>>, %arg5: memref<128x128xf32, #tpu.memory_space<vmem>>) attributes {dimension_semantics = [#tpu.dimension_semantics<parallel>], iteration_bounds = array<i64: 2>, scalar_prefetch = 0 : i64, scratch_operands = 1 : i64, tpu.core_type = #tpu.core_type<tc>, window_params = [{transform_indices = @transform_0, window_bounds = array<i64: 2, 8, 8, 32>}, {pipeline_mode = #tpu.pipeline_mode<synchronous>, transform_indices = @transform_1, window_bounds = array<i64: 3, 32, 128>}, {pipeline_mode = #tpu.pipeline_mode<synchronous>, transform_indices = @transform_2, window_bounds = array<i64: 1, 128>}, {transform_indices = @transform_3, window_bounds = array<i64: 2, 8, 128>}]} {
    %c0 = arith.constant 0 : index
    %c0_0 = arith.constant 0 : index
    %c0_1 = arith.constant 0 : index
    %c0_2 = arith.constant 0 : index
    %0 = vector.load %arg1[%c0, %c0_0, %c0_1, %c0_2] : memref<2x8x8x32xbf16, #tpu.memory_space<vmem>>, vector<2x8x8x32xbf16>
    %1 = vector.shape_cast %0 : vector<2x8x8x32xbf16> to vector<128x32xbf16>
    %2 = tpu.iota {dimensions = array<i32: 1>} : vector<16x8x128xi32>
    %3 = vector.shape_cast %2 : vector<16x8x128xi32> to vector<128x128xi32>
    %c0_3 = arith.constant 0 : index
    %c0_4 = arith.constant 0 : index
    %c0_5 = arith.constant 0 : index
    %4 = vector.load %arg2[%c0_3, %c0_4, %c0_5] : memref<3x32x128xbf16, #tpu.memory_space<vmem>>, vector<1x32x128xbf16>
    %5 = vector.shape_cast %4 : vector<1x32x128xbf16> to vector<32x128xbf16>
    %cst = arith.constant dense<0.000000e+00> : vector<128x128xf32>
    %6 = tpu.matmul %1, %5, %cst {dimension_numbers = #tpu.dot_dimension_numbers<[1], [0], [0], [1], [0, 0, 1, 1], [], []>} : vector<128x32xbf16>, vector<32x128xbf16>, vector<128x128xf32> -> vector<128x128xf32>
    %c0_6 = arith.constant 0 : index
    %c0_7 = arith.constant 0 : index
    %7 = vector.load %arg5[%c0_6, %c0_7] : memref<128x128xf32, #tpu.memory_space<vmem>>, vector<128x128xf32>
    tpu.vector_store %arg5[%c0_6, %c0_7], %6 {strides = array<i32>} : memref<128x128xf32, #tpu.memory_space<vmem>>, vector<128x128xf32>,
    %c1 = arith.constant 1 : index
    %c0_8 = arith.constant 0 : index
    %c0_9 = arith.constant 0 : index
    %8 = vector.load %arg2[%c1, %c0_8, %c0_9] : memref<3x32x128xbf16, #tpu.memory_space<vmem>>, vector<1x32x128xbf16>
    %9 = vector.shape_cast %8 : vector<1x32x128xbf16> to vector<32x128xbf16>
    %cst_10 = arith.constant dense<0.000000e+00> : vector<128x128xf32>
    %10 = tpu.matmul %1, %9, %cst_10 {dimension_numbers = #tpu.dot_dimension_numbers<[1], [0], [0], [1], [0, 0, 1, 1], [], []>} : vector<128x32xbf16>, vector<32x128xbf16>, vector<128x128xf32> -> vector<128x128xf32>
    %c127_i32 = arith.constant 127 : i32
    %11 = tpu.dynamic_rotate %10 by %c127_i32 dim 0 : vector<128x128xf32>, i32 -> vector<128x128xf32>
    %c0_11 = arith.constant 0 : index
    %c0_12 = arith.constant 0 : index
    %12 = vector.load %arg5[%c0_11, %c0_12] : memref<128x128xf32, #tpu.memory_space<vmem>>, vector<128x128xf32>
    %c7_i32 = arith.constant 7 : i32
    %13 = vector.broadcast %c7_i32 : i32 to vector<128x128xi32>
    %14 = arith.cmpi slt, %3, %13 : vector<128x128xi32>
    %cst_13 = arith.constant 0.000000e+00 : f32
    %15 = vector.broadcast %cst_13 : f32 to vector<128x128xf32>
    %16 = arith.select %14, %11, %15 : vector<128x128xi1>, vector<128x128xf32>
    %17 = arith.addf %12, %16 : vector<128x128xf32>
    %c0_14 = arith.constant 0 : index
    %c0_15 = arith.constant 0 : index
    %18 = vector.load %arg5[%c0_14, %c0_15] : memref<128x128xf32, #tpu.memory_space<vmem>>, vector<128x128xf32>
    tpu.vector_store %arg5[%c0_14, %c0_15], %17 {strides = array<i32>} : memref<128x128xf32, #tpu.memory_space<vmem>>, vector<128x128xf32>,
    %c2 = arith.constant 2 : index
    %c0_16 = arith.constant 0 : index
    %c0_17 = arith.constant 0 : index
    %19 = vector.load %arg2[%c2, %c0_16, %c0_17] : memref<3x32x128xbf16, #tpu.memory_space<vmem>>, vector<1x32x128xbf16>
    %20 = vector.shape_cast %19 : vector<1x32x128xbf16> to vector<32x128xbf16>
    %cst_18 = arith.constant dense<0.000000e+00> : vector<128x128xf32>
    %21 = tpu.matmul %1, %20, %cst_18 {dimension_numbers = #tpu.dot_dimension_numbers<[1], [0], [0], [1], [0, 0, 1, 1], [], []>} : vector<128x32xbf16>, vector<32x128xbf16>, vector<128x128xf32> -> vector<128x128xf32>
    %c126_i32 = arith.constant 126 : i32
    %22 = tpu.dynamic_rotate %21 by %c126_i32 dim 0 : vector<128x128xf32>, i32 -> vector<128x128xf32>
    %c0_19 = arith.constant 0 : index
    %c0_20 = arith.constant 0 : index
    %23 = vector.load %arg5[%c0_19, %c0_20] : memref<128x128xf32, #tpu.memory_space<vmem>>, vector<128x128xf32>
    %c6_i32 = arith.constant 6 : i32
    %24 = vector.broadcast %c6_i32 : i32 to vector<128x128xi32>
    %25 = arith.cmpi slt, %3, %24 : vector<128x128xi32>
    %cst_21 = arith.constant 0.000000e+00 : f32
    %26 = vector.broadcast %cst_21 : f32 to vector<128x128xf32>
    %27 = arith.select %25, %22, %26 : vector<128x128xi1>, vector<128x128xf32>
    %28 = arith.addf %23, %27 : vector<128x128xf32>
    %c0_22 = arith.constant 0 : index
    %c0_23 = arith.constant 0 : index
    %29 = vector.load %arg5[%c0_22, %c0_23] : memref<128x128xf32, #tpu.memory_space<vmem>>, vector<128x128xf32>
    tpu.vector_store %arg5[%c0_22, %c0_23], %28 {strides = array<i32>} : memref<128x128xf32, #tpu.memory_space<vmem>>, vector<128x128xf32>,
    %c0_24 = arith.constant 0 : index
    %c0_25 = arith.constant 0 : index
    %30 = vector.load %arg5[%c0_24, %c0_25] : memref<128x128xf32, #tpu.memory_space<vmem>>, vector<128x128xf32>
    %31 = vector.shape_cast %30 : vector<128x128xf32> to vector<2x8x8x128xf32>
    %cst_26 = arith.constant dense<0xFF800000> : vector<2x8x128xf32>
    %32 = vector.multi_reduction <maximumf>, %31, %cst_26 [2] : vector<2x8x8x128xf32> to vector<2x8x128xf32>
    %c0_27 = arith.constant 0 : index
    %c0_28 = arith.constant 0 : index
    %33 = vector.load %arg3[%c0_27, %c0_28] : memref<1x128xf32, #tpu.memory_space<vmem>>, vector<1x128xf32>
    %34 = vector.shape_cast %33 : vector<1x128xf32> to vector<1x1x128xf32>
    %35 = vector.broadcast %34 : vector<1x1x128xf32> to vector<2x8x128xf32>
    %36 = arith.mulf %32, %35 : vector<2x8x128xf32>
    %cst_29 = arith.constant dense<0.000000e+00> : vector<2x8xf32>
    %37 = vector.multi_reduction <add>, %36, %cst_29 [2] : vector<2x8x128xf32> to vector<2x8xf32>
    %38 = vector.shape_cast %37 : vector<2x8xf32> to vector<2x8x1xf32>
    %39 = vector.shape_cast %38 : vector<2x8x1xf32> to vector<2x8x1xf32>
    %40 = vector.broadcast %39 : vector<2x8x1xf32> to vector<2x8x128xf32>
    %c0_30 = arith.constant 0 : index
    %c0_31 = arith.constant 0 : index
    %c0_32 = arith.constant 0 : index
    %41 = vector.load %arg4[%c0_30, %c0_31, %c0_32] : memref<2x8x128xf32, #tpu.memory_space<vmem>>, vector<2x8x128xf32>
    tpu.vector_store %arg4[%c0_30, %c0_31, %c0_32], %40 {strides = array<i32>} : memref<2x8x128xf32, #tpu.memory_space<vmem>>, vector<2x8x128xf32>,
    return
  }
  func.func @transform_0(%arg0: i32) -> (i32, i32, i32, i32) {
    %c0_i32 = arith.constant 0 : i32
    %c0_i32_0 = arith.constant 0 : i32
    %c0_i32_1 = arith.constant 0 : i32
    %c0_i32_2 = arith.constant 0 : i32
    return %c0_i32, %arg0, %c0_i32_0, %c0_i32_1 : i32, i32, i32, i32
  }
  func.func @transform_1(%arg0: i32) -> (i32, i32, i32) {
    %c0_i32 = arith.constant 0 : i32
    %c0_i32_0 = arith.constant 0 : i32
    %c0_i32_1 = arith.constant 0 : i32
    %c0_i32_2 = arith.constant 0 : i32
    return %c0_i32, %c0_i32_0, %c0_i32_1 : i32, i32, i32
  }
  func.func @transform_2(%arg0: i32) -> (i32, i32) {
    %c0_i32 = arith.constant 0 : i32
    %c0_i32_0 = arith.constant 0 : i32
    %c0_i32_1 = arith.constant 0 : i32
    return %c0_i32, %c0_i32_0 : i32, i32
  }
  func.func @transform_3(%arg0: i32) -> (i32, i32, i32) {
    %c0_i32 = arith.constant 0 : i32
    %c0_i32_0 = arith.constant 0 : i32
    %c0_i32_1 = arith.constant 0 : i32
    return %c0_i32, %arg0, %c0_i32_0 : i32, i32, i32
  }
}

</mosaic_0001>

<llo_original>
// kernel: tpu_custom_call.1
$region0: #{tpu_custom_call.1}
  #allocation0 [shape = 'u32[]', space=smem, size = 0x4, offset = 0x4, fixed_abs, tag = 'smem constant byte address 0x4 - core index']
  #allocation1 [shape = 'u32[144,128]{1,0:T(1,128)}', space=vmem, size = 0x12000, scoped, tag = 'internal scratch']
  #allocation2 [shape = 'f32[128,128]{1,0:T(8,128)}', space=vmem, size = 0x10000, scoped, tag = 'scratch operand']
  #allocation9 [shape = 's32[]', space=sflag, size = 0x4, offset = 0, fixed_abs, tag = 'sflag constant byte address 0x0 - dummy sync flag']
  %s0 = inlined_call_operand.hbm [shape: bf16[2,16,8,32], index: 0, kind: input, shape index: {}]
  %s1 = inlined_call_operand.hbm [shape: bf16[3,32,128], index: 1, kind: input, shape index: {}]
  %s2 = inlined_call_operand.vmem [shape: f32[1,128], index: 2, kind: input, shape index: {}]
  %s3 = inlined_call_operand.hbm [shape: f32[2,16,128], index: 3, kind: output, shape index: {}]
  %s4 = sld [smem:[#allocation0]]
  $region53: #{tpu_custom_call.1} parent=0
    _
  %s6 = ssub.s32 1, %s4
  %s7 = scalar_select 0, %s6, %s4
  $region1: #{tpu_custom_call.1} parent=0
    #allocation3 [shape = 'u8[65536]{0}', space=vmem, size = 0x10000, scoped, tag = 'input window, operand 0']
    #allocation4 [shape = 's32[2]{0}', space=sflag, size = 0x8, scoped, tag = 'scoped memory for tpu_custom_call.1']
    #allocation5 [shape = 's32[2]{0}', space=sflag, size = 0x8, scoped, tag = 'scoped memory for tpu_custom_call.1']
    #allocation6 [shape = 'u8[24576]{0}', space=vmem, size = 0x6000, scoped, tag = 'input window, operand 1, single buffered']
    #allocation7 [shape = 's32[1]{0}', space=sflag, size = 0x4, scoped, tag = 'scoped memory for tpu_custom_call.1']
    #allocation8 [shape = 'u8[16384]{0}', space=vmem, size = 0x4000, scoped, tag = 'output window, operand 0']
    %8 = vsyncpa [#allocation4], 0
    %s9 = scalar_lea.sflag [#allocation4], 1
    %10 = vsyncpa %s9, 0
    %11 = vsyncpa [#allocation7], 0
    %12 = vsyncpa [#allocation5], 0
    %s13 = scalar_lea.sflag [#allocation5], 1
    %14 = vsyncpa %s13, 0
    loop: start=0, step=1, limit=4
    $region2: #{tpu_custom_call.1} parent=1 // loop_pre_header
      _
    $region3: #{tpu_custom_call.1} parent=1 // loop_header
      %s16 = sphi 0, %s20
      %p17 = scmp.ge.s32.totalorder %s16, 4
      %s26 = sphi 0, %s28
      %s29 = sphi 0, %s26
      %s30 = sphi 0, %s29
      %s46 = sphi 0, %s30
      %s50 = sphi 0, %s50
      %s52 = sphi 0, %s50
      %s53 = sphi 0, %s52
      %s67 = sphi 0, %s53
      %s71 = sphi 0, %s71
      %s73 = sphi 0, %s71
      %s74 = sphi 0, %s73
      %s88 = sphi 0, %s74
      %s94 = sphi 0, %s96
      %s97 = sphi 0, %s94
      %s98 = sphi 0, %s97
      %s114 = sphi 0, %s98
    $region4: #{tpu_custom_call.1} parent=1 // loop_header_branch
      %19 = sbr.rel (%p17) target = $region8
    $region5: #{tpu_custom_call.1} parent=1 // loop_body
      %s21 = ssub.s32 %s16, 1
      %s22 = ssub.s32 %s16, 2
      %s23 = sadd.s32 %s16, 1
      %s24 = ssub.s32 %s16, %s23
      %p25 = scmp.eq.s32.totalorder %s24, 0
      %s27 = sadd.s32 %s26, 1
      %s28 = scalar_select %p25, %s26, %s27
      %p31 = pneg %p25
      %p32 = scmp.eq.s32.totalorder %s16, 1
      %p33 = por %p31, %p32
      %p34 = scmp.ne.s32.totalorder %s26, %s29
      %p35 = scmp.eq.s32.totalorder %s16, 0
      %p36 = por %p34, %p35
      %p37 = scmp.ne.s32.totalorder %s26, %s29
      %p38 = scmp.eq.s32.totalorder %s21, 1
      %p39 = por %p37, %p38
      %p40 = scmp.ne.s32.totalorder %s29, %s30
      %p41 = scmp.eq.s32.totalorder %s21, 0
      %p42 = por %p40, %p41
      %p43 = scmp.ne.s32.totalorder %s29, %s30
      %p44 = scmp.eq.s32.totalorder %s22, 1
      %p45 = por %p43, %p44
      %p47 = scmp.ne.s32.totalorder %s30, %s46
      %p48 = scmp.eq.s32.totalorder %s22, 0
      %p49 = por %p47, %p48
      %s51 = sadd.s32 %s50, 1
      %p54 = scmp.eq.s32.totalorder %s16, 1
      %p55 = scmp.ne.s32.totalorder %s50, %s52
      %p56 = scmp.eq.s32.totalorder %s16, 0
      %p57 = por %p55, %p56
      %p58 = scmp.ne.s32.totalorder %s50, %s52
      %p59 = scmp.eq.s32.totalorder %s21, 1
      %p60 = por %p58, %p59
      %p61 = scmp.ne.s32.totalorder %s52, %s53
      %p62 = scmp.eq.s32.totalorder %s21, 0
      %p63 = por %p61, %p62
      %p64 = scmp.ne.s32.totalorder %s52, %s53
      %p65 = scmp.eq.s32.totalorder %s22, 1
      %p66 = por %p64, %p65
      %p68 = scmp.ne.s32.totalorder %s53, %s67
      %p69 = scmp.eq.s32.totalorder %s22, 0
      %p70 = por %p68, %p69
      %s72 = sadd.s32 %s71, 1
      %p75 = scmp.eq.s32.totalorder %s16, 1
      %p76 = scmp.ne.s32.totalorder %s71, %s73
      %p77 = scmp.eq.s32.totalorder %s16, 0
      %p78 = por %p76, %p77
      %p79 = scmp.ne.s32.totalorder %s71, %s73
      %p80 = scmp.eq.s32.totalorder %s21, 1
      %p81 = por %p79, %p80
      %p82 = scmp.ne.s32.totalorder %s73, %s74
      %p83 = scmp.eq.s32.totalorder %s21, 0
      %p84 = por %p82, %p83
      %p85 = scmp.ne.s32.totalorder %s73, %s74
      %p86 = scmp.eq.s32.totalorder %s22, 1
      %p87 = por %p85, %p86
      %p89 = scmp.ne.s32.totalorder %s74, %s88
      %p90 = scmp.eq.s32.totalorder %s22, 0
      %p91 = por %p89, %p90
      %s92 = ssub.s32 %s16, %s23
      %p93 = scmp.eq.s32.totalorder %s92, 0
      %s95 = sadd.s32 %s94, 1
      %s96 = scalar_select %p93, %s94, %s95
      %p99 = pneg %p93
      %p100 = scmp.eq.s32.totalorder %s16, 1
      %p101 = por %p99, %p100
      %p102 = scmp.ne.s32.totalorder %s94, %s97
      %p103 = scmp.eq.s32.totalorder %s16, 0
      %p104 = por %p102, %p103
      %p105 = scmp.ne.s32.totalorder %s94, %s97
      %p106 = scmp.eq.s32.totalorder %s21, 1
      %p107 = por %p105, %p106
      %p108 = scmp.ne.s32.totalorder %s97, %s98
      %p109 = scmp.eq.s32.totalorder %s21, 0
      %p110 = por %p108, %p109
      %p111 = scmp.ne.s32.totalorder %s97, %s98
      %p112 = scmp.eq.s32.totalorder %s22, 1
      %p113 = por %p111, %p112
      %p115 = scmp.ne.s32.totalorder %s98, %s114
      %p116 = scmp.eq.s32.totalorder %s22, 0
      %p117 = por %p115, %p116
      %p118 = scmp.le.s32.totalorder 1, %s16
      %p119 = scmp.lt.s32.totalorder %s16, 3
      %p120 = pnand %p118, %p119
      %p121 = pneg %p120
      // Predicated region
      $region9: #{tpu_custom_call.1} parent=5 // pred_check
        _
      $region10: #{tpu_custom_call.1} parent=5 // pred_check_branch
        %123 = sbr.rel (%p120) target = $region12
      $region11: #{tpu_custom_call.1} parent=5 // pred_region
        %s124 = ssub.s32 %s16, 1
        // Predicated region
        $region13: #{tpu_custom_call.1} parent=11 // pred_check
          %p125 = pneg %p63
        $region14: #{tpu_custom_call.1} parent=11 // pred_check_branch
          %127 = sbr.rel (%p125) target = $region16
        $region15: #{tpu_custom_call.1} parent=11 // pred_region
          %s129 = ssub.s32 768, 768
          %130 = vsyncadd [#allocation7], %s129
          %s131 = sshll.u32 [#allocation6], 4
          %s132 = int_to_ptr.vmem [resolvable:$true] %s131
          %137 = dma.hbm_to_vmem [thread:$0]  %s1, 768, %s132, [#allocation7], 64, 64, 4
        $region16: #{tpu_custom_call.1} parent=11 // pred_fallthru
          _
        // Predicated region
        $region17: #{tpu_custom_call.1} parent=11 // pred_check
          %p138 = pneg %p84
        $region18: #{tpu_custom_call.1} parent=11 // pred_check_branch
          %140 = sbr.rel (%p138) target = $region20
        $region19: #{tpu_custom_call.1} parent=11 // pred_region
          _
        $region20: #{tpu_custom_call.1} parent=11 // pred_fallthru
          _
      $region12: #{tpu_custom_call.1} parent=5 // pred_fallthru
        _
      %p141 = scmp.lt.s32.totalorder %s16, 2
      // Predicated region
      $region21: #{tpu_custom_call.1} parent=5 // pred_check
        %p142 = pneg %p141
      $region22: #{tpu_custom_call.1} parent=5 // pred_check_branch
        %144 = sbr.rel (%p142) target = $region24
      $region23: #{tpu_custom_call.1} parent=5 // pred_region
        // Predicated region
        $region25: #{tpu_custom_call.1} parent=23 // pred_check
          %p145 = pneg %p36
        $region26: #{tpu_custom_call.1} parent=23 // pred_check_branch
          %147 = sbr.rel (%p145) target = $region28
        $region27: #{tpu_custom_call.1} parent=23 // pred_region
          #allocation10 [shape = 'u32[6]{0}', space=smem, size = 0x18, scoped, tag = 'DMA stride descriptor']
          %s148 = sand.u32 %s26, 1
          %s149 = scalar_lea.sflag [#allocation4], %s148
          %s150 = sand.u32 %s26, 1
          %s151 = smul.addr %s150, 64
          %s152 = scalar_lea.vmem [#allocation3], %s151
          %s153 = smul.u32 8, %s16
          %s155 = ssub.s32 1024, 1024
          %156 = vsyncadd %s149, %s155
          %s157 = smul.addr %s153, 64
          %s158 = scalar_lea.hbm %s0, %s157
          %s160 = sshll.u32 1, 14
          %s161 = sxor.u32 4294967295, %s160
          %s163 = sld [smem:[#allocation0]]
          %s164 = sadd.s32 2, %s163
          %s166 = sshll.u32 7, 26
          %s167 = sxor.u32 4294967295, %s166
          %s168 = sand.u32 0, %s167
          %s169 = sshll.u32 %s164, 26
          %s170 = sor.u32 %s168, %s169
          %s171 = sshll.u32 %s152, 4
          %s172 = int_to_ptr.vmem [resolvable:$true] %s171
          %178 = sst [smem:[#allocation10]] 1024
          %s179 = scalar_lea.smem [#allocation10], 1
          %180 = sst [smem:[%s179]] 512
          %s181 = scalar_lea.smem [#allocation10], 2
          %182 = sst [smem:[%s181]] 8
          %s183 = scalar_lea.smem [#allocation10], 3
          %184 = sst [smem:[%s183]] 64
          %s185 = scalar_lea.smem [#allocation10], 4
          %186 = sst [smem:[%s185]] 64
          %s187 = scalar_lea.smem [#allocation10], 5
          %188 = sst [smem:[%s187]] 4
          %190 = dma.general %s158, 1024, %s172, %s149, [#allocation9], [#allocation10], %s170, 0
        $region28: #{tpu_custom_call.1} parent=23 // pred_fallthru
          _
      $region24: #{tpu_custom_call.1} parent=5 // pred_fallthru
        _
      %p191 = scmp.le.s32.totalorder 1, %s16
      %p192 = scmp.lt.s32.totalorder %s16, 3
      %p193 = pnand %p191, %p192
      %p194 = pneg %p193
      // Predicated region
      $region29: #{tpu_custom_call.1} parent=5 // pred_check
        _
      $region30: #{tpu_custom_call.1} parent=5 // pred_check_branch
        %196 = sbr.rel (%p193) target = $region32
      $region31: #{tpu_custom_call.1} parent=5 // pred_region
        %s197 = ssub.s32 %s16, 1
        %s198 = sand.u32 %s29, 1
        %s199 = scalar_lea.sflag [#allocation4], %s198
        %s200 = sand.u32 %s29, 1
        %s201 = smul.addr %s200, 64
        %s202 = scalar_lea.vmem [#allocation3], %s201
        // Predicated region
        $region33: #{tpu_custom_call.1} parent=31 // pred_check
          %p203 = pneg %p42
        $region34: #{tpu_custom_call.1} parent=31 // pred_check_branch
          %205 = sbr.rel (%p203) target = $region36
        $region35: #{tpu_custom_call.1} parent=31 // pred_region
          %206 = dma.done %s199, 1024
        $region36: #{tpu_custom_call.1} parent=31 // pred_fallthru
          _
        // Predicated region
        $region37: #{tpu_custom_call.1} parent=31 // pred_check
          %p207 = pneg %p63
        $region38: #{tpu_custom_call.1} parent=31 // pred_check_branch
          %209 = sbr.rel (%p207) target = $region40
        $region39: #{tpu_custom_call.1} parent=31 // pred_region
          %210 = dma.done [#allocation7], 768
        $region40: #{tpu_custom_call.1} parent=31 // pred_fallthru
          _
        %s211 = sand.u32 %s29, 1
        %s212 = scalar_lea.sflag [#allocation4], %s211
        %s213 = sand.u32 %s29, 1
        %s214 = smul.addr %s213, 64
        %s215 = scalar_lea.vmem [#allocation3], %s214
        %p216 = pneg %p42
        %p217 = pneg %p39
        %p218 = pneg %p63
        %p219 = pneg %p60
        %p220 = pneg %p84
        %p221 = pneg %p81
        %p222 = pneg %p110
        %p223 = pneg %p107
        %s224 = sand.u32 %s97, 1
        %s225 = scalar_lea.sflag [#allocation5], %s224
        %s226 = sand.u32 %s97, 1
        %s227 = smul.addr %s226, 16
        %s228 = scalar_lea.vmem [#allocation8], %s227
        %s229 = smul.u32 8, %s21
        %v231 = vld [vmem:[%s202] sm:$0xf]
        %v232 = vld [vmem:[%s202 + $0x4] sm:$0xf]
        %v233 = vld [vmem:[%s202 + $0x8] sm:$0xf]
        %v234 = vld [vmem:[%s202 + $0xc] sm:$0xf]
        %v235 = vld [vmem:[%s202 + $0x10] sm:$0xf]
        %v236 = vld [vmem:[%s202 + $0x14] sm:$0xf]
        %v237 = vld [vmem:[%s202 + $0x18] sm:$0xf]
        %v238 = vld [vmem:[%s202 + $0x1c] sm:$0xf]
        %v239 = vld [vmem:[%s202 + $0x20] sm:$0xf]
        %v240 = vld [vmem:[%s202 + $0x24] sm:$0xf]
        %v241 = vld [vmem:[%s202 + $0x28] sm:$0xf]
        %v242 = vld [vmem:[%s202 + $0x2c] sm:$0xf]
        %v243 = vld [vmem:[%s202 + $0x30] sm:$0xf]
        %v244 = vld [vmem:[%s202 + $0x34] sm:$0xf]
        %v245 = vld [vmem:[%s202 + $0x38] sm:$0xf]
        %v246 = vld [vmem:[%s202 + $0x3c] sm:$0xf]
        %v247 = vlaneseq
        %v248 = vshrl.u32 %v247, 7
        %v249 = vld [vmem:[#allocation6] sm:$0xf]
        %v250 = vld [vmem:[#allocation6 + $0x4] sm:$0xf]
        %v251 = vld [vmem:[#allocation6 + $0x8] sm:$0xf]
        %v252 = vld [vmem:[#allocation6 + $0xc] sm:$0xf]
        %v269 = vunpack.c.l.b16 %v231
        %v270 = vunpack.c.l.b16 %v232
        %v271 = vunpack.c.l.b16 %v233
        %v272 = vunpack.c.l.b16 %v234
        %v273 = vunpack.c.l.b16 %v235
        %v274 = vunpack.c.l.b16 %v236
        %v275 = vunpack.c.l.b16 %v237
        %v276 = vunpack.c.l.b16 %v238
        %v277 = vunpack.c.l.b16 %v239
        %v278 = vunpack.c.l.b16 %v240
        %v279 = vunpack.c.l.b16 %v241
        %v280 = vunpack.c.l.b16 %v242
        %v281 = vunpack.c.l.b16 %v243
        %v282 = vunpack.c.l.b16 %v244
        %v283 = vunpack.c.l.b16 %v245
        %v284 = vunpack.c.l.b16 %v246
        %v285 = vpack.c.b16 %v270, %v269
        %v286 = vpack.c.b16 %v272, %v271
        %v287 = vpack.c.b16 %v274, %v273
        %v288 = vpack.c.b16 %v276, %v275
        %v289 = vpack.c.b16 %v278, %v277
        %v290 = vpack.c.b16 %v280, %v279
        %v291 = vpack.c.b16 %v282, %v281
        %v292 = vpack.c.b16 %v284, %v283
        %v297 = vunpack.c.l.b16 %v249
        %v298 = vunpack.c.l.b16 %v250
        %v299 = vunpack.c.l.b16 %v251
        %v300 = vunpack.c.l.b16 %v252
        %v301 = vpack.c.b16 %v298, %v297
        %v302 = vpack.c.b16 %v300, %v299
        %vm305 = vcmask 261120
        %v307 = vsel %vm305, %v285, 0
        %v310 = vsel %vm305, %v286, 0
        %v313 = vsel %vm305, %v287, 0
        %v316 = vsel %vm305, %v288, 0
        %v319 = vsel %vm305, %v289, 0
        %v322 = vsel %vm305, %v290, 0
        %v325 = vsel %vm305, %v291, 0
        %v328 = vsel %vm305, %v292, 0
        %330 = vmatprep.subr.bf16.mxu0 0
        %331 = vmatpush1.bf16.msra.mxu0 %v301
        %332 = vmatprep.subr.bf16.mxu0 0
        %333 = vmatpush1.bf16.msra.mxu0 %v302
        %334 = vmatprep.subr.bf16.mxu0 0
        %335 = vmatpush1.bf16.msra.mxu0 0
        %336 = vmatprep.subr.bf16.mxu0 0
        %337 = vmatpush1.bf16.msra.mxu0 0
        %338 = vmatprep.subr.bf16.mxu0 0
        %339 = vmatpush1.bf16.msra.mxu0 0
        %340 = vmatprep.subr.bf16.mxu0 0
        %341 = vmatpush1.bf16.msra.mxu0 0
        %342 = vmatprep.subr.bf16.mxu0 0
        %343 = vmatpush1.bf16.msra.mxu0 0
        %344 = vmatprep.subr.bf16.mxu0 0
        %345 = vmatpush1.bf16.msra.mxu0 0
        %346 = vmatprep.subr.bf16.mxu0 0
        %347 = vmatpush1.bf16.msra.mxu0 0
        %348 = vmatprep.subr.bf16.mxu0 0
        %349 = vmatpush1.bf16.msra.mxu0 0
        %350 = vmatprep.subr.bf16.mxu0 0
        %351 = vmatpush1.bf16.msra.mxu0 0
        %352 = vmatprep.subr.bf16.mxu0 0
        %353 = vmatpush1.bf16.msra.mxu0 0
        %354 = vmatprep.subr.bf16.mxu0 0
        %355 = vmatpush1.bf16.msra.mxu0 0
        %356 = vmatprep.subr.bf16.mxu0 0
        %357 = vmatpush1.bf16.msra.mxu0 0
        %358 = vmatprep.subr.bf16.mxu0 0
        %359 = vmatpush1.bf16.msra.mxu0 0
        %360 = vmatprep.subr.bf16.mxu0 0
        %361 = vmatpush1.bf16.msra.mxu0 0
        %362 = vmatprep.mubr.bf16.mxu0 0
        %363 = vmatmul.mubr.bf16.gmra.mrb[0].mxu0 %v307
        %v364 = vpop.f32.mrb[0].mxu0
        %v365 = vadd.f32 0.0, %v364
        %v366 = vpop.f32.mrb[0].mxu0
        %v367 = vpop.f32.mrb[0].mxu0
        %v368 = vadd.f32 0.0, %v367
        %v369 = vpop.f32.mrb[0].mxu0
        %370 = vmatprep.mubr.bf16.mxu0 0
        %371 = vmatmul.mubr.bf16.gmra.mrb[0].mxu0 %v310
        %v372 = vpop.f32.mrb[0].mxu0
        %v373 = vadd.f32 0.0, %v372
        %v374 = vpop.f32.mrb[0].mxu0
        %v375 = vpop.f32.mrb[0].mxu0
        %v376 = vadd.f32 0.0, %v375
        %v377 = vpop.f32.mrb[0].mxu0
        %378 = vmatprep.mubr.bf16.mxu0 0
        %379 = vmatmul.mubr.bf16.gmra.mrb[0].mxu0 %v313
        %v380 = vpop.f32.mrb[0].mxu0
        %v381 = vadd.f32 0.0, %v380
        %v382 = vpop.f32.mrb[0].mxu0
        %v383 = vpop.f32.mrb[0].mxu0
        %v384 = vadd.f32 0.0, %v383
        %v385 = vpop.f32.mrb[0].mxu0
        %386 = vmatprep.mubr.bf16.mxu0 0
        %387 = vmatmul.mubr.bf16.gmra.mrb[0].mxu0 %v316
        %v388 = vpop.f32.mrb[0].mxu0
        %v389 = vadd.f32 0.0, %v388
        %v390 = vpop.f32.mrb[0].mxu0
        %v391 = vpop.f32.mrb[0].mxu0
        %v392 = vadd.f32 0.0, %v391
        %v393 = vpop.f32.mrb[0].mxu0
        %394 = vmatprep.mubr.bf16.mxu0 0
        %395 = vmatmul.mubr.bf16.gmra.mrb[0].mxu0 %v319
        %v396 = vpop.f32.mrb[0].mxu0
        %v397 = vadd.f32 0.0, %v396
        %v398 = vpop.f32.mrb[0].mxu0
        %v399 = vpop.f32.mrb[0].mxu0
        %v400 = vadd.f32 0.0, %v399
        %v401 = vpop.f32.mrb[0].mxu0
        %402 = vmatprep.mubr.bf16.mxu0 0
        %403 = vmatmul.mubr.bf16.gmra.mrb[0].mxu0 %v322
        %v404 = vpop.f32.mrb[0].mxu0
        %v405 = vadd.f32 0.0, %v404
        %v406 = vpop.f32.mrb[0].mxu0
        %v407 = vpop.f32.mrb[0].mxu0
        %v408 = vadd.f32 0.0, %v407
        %v409 = vpop.f32.mrb[0].mxu0
        %410 = vmatprep.mubr.bf16.mxu0 0
        %411 = vmatmul.mubr.bf16.gmra.mrb[0].mxu0 %v325
        %v412 = vpop.f32.mrb[0].mxu0
        %v413 = vadd.f32 0.0, %v412
        %v414 = vpop.f32.mrb[0].mxu0
        %v415 = vpop.f32.mrb[0].mxu0
        %v416 = vadd.f32 0.0, %v415
        %v417 = vpop.f32.mrb[0].mxu0
        %418 = vmatprep.mubr.bf16.mxu0 0
        %419 = vmatmul.mubr.bf16.gmra.mrb[0].mxu0 %v328
        %v420 = vpop.f32.mrb[0].mxu0
        %v421 = vadd.f32 0.0, %v420
        %v422 = vpop.f32.mrb[0].mxu0
        %v423 = vpop.f32.mrb[0].mxu0
        %v424 = vadd.f32 0.0, %v423
        %v425 = vpop.f32.mrb[0].mxu0
        %426 = vdwg.mxu0
        %427 = vst [vmem:[#allocation2] sm:$0xff] %v365
        %428 = vst [vmem:[#allocation2 + $0x8] sm:$0xff] %v368
        %429 = vst [vmem:[#allocation2 + $0x10] sm:$0xff] %v373
        %430 = vst [vmem:[#allocation2 + $0x18] sm:$0xff] %v376
        %431 = vst [vmem:[#allocation2 + $0x20] sm:$0xff] %v381
        %432 = vst [vmem:[#allocation2 + $0x28] sm:$0xff] %v384
        %433 = vst [vmem:[#allocation2 + $0x30] sm:$0xff] %v389
        %434 = vst [vmem:[#allocation2 + $0x38] sm:$0xff] %v392
        %435 = vst [vmem:[#allocation2 + $0x40] sm:$0xff] %v397
        %436 = vst [vmem:[#allocation2 + $0x48] sm:$0xff] %v400
        %437 = vst [vmem:[#allocation2 + $0x50] sm:$0xff] %v405
        %438 = vst [vmem:[#allocation2 + $0x58] sm:$0xff] %v408
        %439 = vst [vmem:[#allocation2 + $0x60] sm:$0xff] %v413
        %440 = vst [vmem:[#allocation2 + $0x68] sm:$0xff] %v416
        %441 = vst [vmem:[#allocation2 + $0x70] sm:$0xff] %v421
        %442 = vst [vmem:[#allocation2 + $0x78] sm:$0xff] %v424
        %s443 = scalar_lea.vmem [#allocation6], 16
        %v444 = vld [vmem:[%s443] sm:$0xf]
        %v445 = vld [vmem:[%s443 + $0x4] sm:$0xf]
        %v446 = vld [vmem:[%s443 + $0x8] sm:$0xf]
        %v447 = vld [vmem:[%s443 + $0xc] sm:$0xf]
        %v452 = vunpack.c.l.b16 %v444
        %v453 = vunpack.c.l.b16 %v445
        %v454 = vunpack.c.l.b16 %v446
        %v455 = vunpack.c.l.b16 %v447
        %v456 = vpack.c.b16 %v453, %v452
        %v457 = vpack.c.b16 %v455, %v454
        %460 = vmatprep.subr.bf16.mxu0 0
        %461 = vmatpush1.bf16.msra.mxu0 %v456
        %462 = vmatprep.subr.bf16.mxu0 0
        %463 = vmatpush1.bf16.msra.mxu0 %v457
        %464 = vmatprep.subr.bf16.mxu0 0
        %465 = vmatpush1.bf16.msra.mxu0 0
        %466 = vmatprep.subr.bf16.mxu0 0
        %467 = vmatpush1.bf16.msra.mxu0 0
        %468 = vmatprep.subr.bf16.mxu0 0
        %469 = vmatpush1.bf16.msra.mxu0 0
        %470 = vmatprep.subr.bf16.mxu0 0
        %471 = vmatpush1.bf16.msra.mxu0 0
        %472 = vmatprep.subr.bf16.mxu0 0
        %473 = vmatpush1.bf16.msra.mxu0 0
        %474 = vmatprep.subr.bf16.mxu0 0
        %475 = vmatpush1.bf16.msra.mxu0 0
        %476 = vmatprep.subr.bf16.mxu0 0
        %477 = vmatpush1.bf16.msra.mxu0 0
        %478 = vmatprep.subr.bf16.mxu0 0
        %479 = vmatpush1.bf16.msra.mxu0 0
        %480 = vmatprep.subr.bf16.mxu0 0
        %481 = vmatpush1.bf16.msra.mxu0 0
        %482 = vmatprep.subr.bf16.mxu0 0
        %483 = vmatpush1.bf16.msra.mxu0 0
        %484 = vmatprep.subr.bf16.mxu0 0
        %485 = vmatpush1.bf16.msra.mxu0 0
        %486 = vmatprep.subr.bf16.mxu0 0
        %487 = vmatpush1.bf16.msra.mxu0 0
        %488 = vmatprep.subr.bf16.mxu0 0
        %489 = vmatpush1.bf16.msra.mxu0 0
        %490 = vmatprep.subr.bf16.mxu0 0
        %491 = vmatpush1.bf16.msra.mxu0 0
        %492 = vmatprep.mubr.bf16.mxu0 0
        %493 = vmatmul.mubr.bf16.gmra.mrb[0].mxu0 %v307
        %v494 = vpop.f32.mrb[0].mxu0
        %v495 = vadd.f32 0.0, %v494
        %v496 = vpop.f32.mrb[0].mxu0
        %v497 = vpop.f32.mrb[0].mxu0
        %v498 = vadd.f32 0.0, %v497
        %v499 = vpop.f32.mrb[0].mxu0
        %500 = vmatprep.mubr.bf16.mxu0 0
        %501 = vmatmul.mubr.bf16.gmra.mrb[0].mxu0 %v310
        %v502 = vpop.f32.mrb[0].mxu0
        %v503 = vadd.f32 0.0, %v502
        %v504 = vpop.f32.mrb[0].mxu0
        %v505 = vpop.f32.mrb[0].mxu0
        %v506 = vadd.f32 0.0, %v505
        %v507 = vpop.f32.mrb[0].mxu0
        %508 = vmatprep.mubr.bf16.mxu0 0
        %509 = vmatmul.mubr.bf16.gmra.mrb[0].mxu0 %v313
        %v510 = vpop.f32.mrb[0].mxu0
        %v511 = vadd.f32 0.0, %v510
        %v512 = vpop.f32.mrb[0].mxu0
        %v513 = vpop.f32.mrb[0].mxu0
        %v514 = vadd.f32 0.0, %v513
        %v515 = vpop.f32.mrb[0].mxu0
        %516 = vmatprep.mubr.bf16.mxu0 0
        %517 = vmatmul.mubr.bf16.gmra.mrb[0].mxu0 %v316
        %v518 = vpop.f32.mrb[0].mxu0
        %v519 = vadd.f32 0.0, %v518
        %v520 = vpop.f32.mrb[0].mxu0
        %v521 = vpop.f32.mrb[0].mxu0
        %v522 = vadd.f32 0.0, %v521
        %v523 = vpop.f32.mrb[0].mxu0
        %524 = vmatprep.mubr.bf16.mxu0 0
        %525 = vmatmul.mubr.bf16.gmra.mrb[0].mxu0 %v319
        %v526 = vpop.f32.mrb[0].mxu0
        %v527 = vadd.f32 0.0, %v526
        %v528 = vpop.f32.mrb[0].mxu0
        %v529 = vpop.f32.mrb[0].mxu0
        %v530 = vadd.f32 0.0, %v529
        %v531 = vpop.f32.mrb[0].mxu0
        %532 = vmatprep.mubr.bf16.mxu0 0
        %533 = vmatmul.mubr.bf16.gmra.mrb[0].mxu0 %v322
        %v534 = vpop.f32.mrb[0].mxu0
        %v535 = vadd.f32 0.0, %v534
        %v536 = vpop.f32.mrb[0].mxu0
        %v537 = vpop.f32.mrb[0].mxu0
        %v538 = vadd.f32 0.0, %v537
        %v539 = vpop.f32.mrb[0].mxu0
        %540 = vmatprep.mubr.bf16.mxu0 0
        %541 = vmatmul.mubr.bf16.gmra.mrb[0].mxu0 %v325
        %v542 = vpop.f32.mrb[0].mxu0
        %v543 = vadd.f32 0.0, %v542
        %v544 = vpop.f32.mrb[0].mxu0
        %v545 = vpop.f32.mrb[0].mxu0
        %v546 = vadd.f32 0.0, %v545
        %v547 = vpop.f32.mrb[0].mxu0
        %548 = vmatprep.mubr.bf16.mxu0 0
        %549 = vmatmul.mubr.bf16.gmra.mrb[0].mxu0 %v328
        %v550 = vpop.f32.mrb[0].mxu0
        %v551 = vadd.f32 0.0, %v550
        %v552 = vpop.f32.mrb[0].mxu0
        %v553 = vpop.f32.mrb[0].mxu0
        %v554 = vadd.f32 0.0, %v553
        %v555 = vpop.f32.mrb[0].mxu0
        %556 = vdwg.mxu0
        %v557 = vrot.slane %v495, 1
        %v558 = vrot.slane %v498, 1
        %v559 = vrot.slane %v503, 1
        %v560 = vrot.slane %v506, 1
        %v561 = vrot.slane %v511, 1
        %v562 = vrot.slane %v514, 1
        %v563 = vrot.slane %v519, 1
        %v564 = vrot.slane %v522, 1
        %v565 = vrot.slane %v527, 1
        %v566 = vrot.slane %v530, 1
        %v567 = vrot.slane %v535, 1
        %v568 = vrot.slane %v538, 1
        %v569 = vrot.slane %v543, 1
        %v570 = vrot.slane %v546, 1
        %v571 = vrot.slane %v551, 1
        %v572 = vrot.slane %v554, 1
        %vm573 = vcmp.lt.s32.totalorder %v248, 7
        %v574 = vsel %vm573, %v571, %v572
        %v575 = vsel %vm573, %v570, %v571
        %v576 = vsel %vm573, %v569, %v570
        %v577 = vsel %vm573, %v568, %v569
        %v578 = vsel %vm573, %v567, %v568
        %v579 = vsel %vm573, %v566, %v567
        %v580 = vsel %vm573, %v565, %v566
        %v581 = vsel %vm573, %v564, %v565
        %v582 = vsel %vm573, %v563, %v564
        %v583 = vsel %vm573, %v562, %v563
        %v584 = vsel %vm573, %v561, %v562
        %v585 = vsel %vm573, %v560, %v561
        %v586 = vsel %vm573, %v559, %v560
        %v587 = vsel %vm573, %v558, %v559
        %v588 = vsel %vm573, %v557, %v558
        %v589 = vsel %vm573, %v572, %v557
        %v590 = vld [vmem:[#allocation2] sm:$0xff]
        %v591 = vld [vmem:[#allocation2 + $0x8] sm:$0xff]
        %v592 = vld [vmem:[#allocation2 + $0x10] sm:$0xff]
        %v593 = vld [vmem:[#allocation2 + $0x18] sm:$0xff]
        %v594 = vld [vmem:[#allocation2 + $0x20] sm:$0xff]
        %v595 = vld [vmem:[#allocation2 + $0x28] sm:$0xff]
        %v596 = vld [vmem:[#allocation2 + $0x30] sm:$0xff]
        %v597 = vld [vmem:[#allocation2 + $0x38] sm:$0xff]
        %v598 = vld [vmem:[#allocation2 + $0x40] sm:$0xff]
        %v599 = vld [vmem:[#allocation2 + $0x48] sm:$0xff]
        %v600 = vld [vmem:[#allocation2 + $0x50] sm:$0xff]
        %v601 = vld [vmem:[#allocation2 + $0x58] sm:$0xff]
        %v602 = vld [vmem:[#allocation2 + $0x60] sm:$0xff]
        %v603 = vld [vmem:[#allocation2 + $0x68] sm:$0xff]
        %v604 = vld [vmem:[#allocation2 + $0x70] sm:$0xff]
        %v605 = vld [vmem:[#allocation2 + $0x78] sm:$0xff]
        %v606 = vsel %vm573, %v588, 0.0
        %v607 = vsel %vm573, %v587, 0.0
        %v608 = vsel %vm573, %v586, 0.0
        %v609 = vsel %vm573, %v585, 0.0
        %v610 = vsel %vm573, %v584, 0.0
        %v611 = vsel %vm573, %v583, 0.0
        %v612 = vsel %vm573, %v582, 0.0
        %v613 = vsel %vm573, %v581, 0.0
        %v614 = vsel %vm573, %v580, 0.0
        %v615 = vsel %vm573, %v579, 0.0
        %v616 = vsel %vm573, %v578, 0.0
        %v617 = vsel %vm573, %v577, 0.0
        %v618 = vsel %vm573, %v576, 0.0
        %v619 = vsel %vm573, %v575, 0.0
        %v620 = vsel %vm573, %v574, 0.0
        %v621 = vsel %vm573, %v589, 0.0
        %v622 = vadd.f32 %v590, %v606
        %v623 = vadd.f32 %v591, %v607
        %v624 = vadd.f32 %v592, %v608
        %v625 = vadd.f32 %v593, %v609
        %v626 = vadd.f32 %v594, %v610
        %v627 = vadd.f32 %v595, %v611
        %v628 = vadd.f32 %v596, %v612
        %v629 = vadd.f32 %v597, %v613
        %v630 = vadd.f32 %v598, %v614
        %v631 = vadd.f32 %v599, %v615
        %v632 = vadd.f32 %v600, %v616
        %v633 = vadd.f32 %v601, %v617
        %v634 = vadd.f32 %v602, %v618
        %v635 = vadd.f32 %v603, %v619
        %v636 = vadd.f32 %v604, %v620
        %v637 = vadd.f32 %v605, %v621
        %638 = vst [vmem:[#allocation2] sm:$0xff] %v622
        %639 = vst [vmem:[#allocation2 + $0x8] sm:$0xff] %v623
        %640 = vst [vmem:[#allocation2 + $0x10] sm:$0xff] %v624
        %641 = vst [vmem:[#allocation2 + $0x18] sm:$0xff] %v625
        %642 = vst [vmem:[#allocation2 + $0x20] sm:$0xff] %v626
        %643 = vst [vmem:[#allocation2 + $0x28] sm:$0xff] %v627
        %644 = vst [vmem:[#allocation2 + $0x30] sm:$0xff] %v628
        %645 = vst [vmem:[#allocation2 + $0x38] sm:$0xff] %v629
        %646 = vst [vmem:[#allocation2 + $0x40] sm:$0xff] %v630
        %647 = vst [vmem:[#allocation2 + $0x48] sm:$0xff] %v631
        %648 = vst [vmem:[#allocation2 + $0x50] sm:$0xff] %v632
        %649 = vst [vmem:[#allocation2 + $0x58] sm:$0xff] %v633
        %650 = vst [vmem:[#allocation2 + $0x60] sm:$0xff] %v634
        %651 = vst [vmem:[#allocation2 + $0x68] sm:$0xff] %v635
        %652 = vst [vmem:[#allocation2 + $0x70] sm:$0xff] %v636
        %653 = vst [vmem:[#allocation2 + $0x78] sm:$0xff] %v637
        %s654 = scalar_lea.vmem [#allocation6], 32
        %v655 = vld [vmem:[%s654] sm:$0xf]
        %v656 = vld [vmem:[%s654 + $0x4] sm:$0xf]
        %v657 = vld [vmem:[%s654 + $0x8] sm:$0xf]
        %v658 = vld [vmem:[%s654 + $0xc] sm:$0xf]
        %v663 = vunpack.c.l.b16 %v655
        %v664 = vunpack.c.l.b16 %v656
        %v665 = vunpack.c.l.b16 %v657
        %v666 = vunpack.c.l.b16 %v658
        %v667 = vpack.c.b16 %v664, %v663
        %v668 = vpack.c.b16 %v666, %v665
        %671 = vmatprep.subr.bf16.mxu0 0
        %672 = vmatpush1.bf16.msra.mxu0 %v667
        %673 = vmatprep.subr.bf16.mxu0 0
        %674 = vmatpush1.bf16.msra.mxu0 %v668
        %675 = vmatprep.subr.bf16.mxu0 0
        %676 = vmatpush1.bf16.msra.mxu0 0
        %677 = vmatprep.subr.bf16.mxu0 0
        %678 = vmatpush1.bf16.msra.mxu0 0
        %679 = vmatprep.subr.bf16.mxu0 0
        %680 = vmatpush1.bf16.msra.mxu0 0
        %681 = vmatprep.subr.bf16.mxu0 0
        %682 = vmatpush1.bf16.msra.mxu0 0
        %683 = vmatprep.subr.bf16.mxu0 0
        %684 = vmatpush1.bf16.msra.mxu0 0
        %685 = vmatprep.subr.bf16.mxu0 0
        %686 = vmatpush1.bf16.msra.mxu0 0
        %687 = vmatprep.subr.bf16.mxu0 0
        %688 = vmatpush1.bf16.msra.mxu0 0
        %689 = vmatprep.subr.bf16.mxu0 0
        %690 = vmatpush1.bf16.msra.mxu0 0
        %691 = vmatprep.subr.bf16.mxu0 0
        %692 = vmatpush1.bf16.msra.mxu0 0
        %693 = vmatprep.subr.bf16.mxu0 0
        %694 = vmatpush1.bf16.msra.mxu0 0
        %695 = vmatprep.subr.bf16.mxu0 0
        %696 = vmatpush1.bf16.msra.mxu0 0
        %697 = vmatprep.subr.bf16.mxu0 0
        %698 = vmatpush1.bf16.msra.mxu0 0
        %699 = vmatprep.subr.bf16.mxu0 0
        %700 = vmatpush1.bf16.msra.mxu0 0
        %701 = vmatprep.subr.bf16.mxu0 0
        %702 = vmatpush1.bf16.msra.mxu0 0
        %703 = vmatprep.mubr.bf16.mxu0 0
        %704 = vmatmul.mubr.bf16.gmra.mrb[0].mxu0 %v307
        %v705 = vpop.f32.mrb[0].mxu0
        %v706 = vadd.f32 0.0, %v705
        %v707 = vpop.f32.mrb[0].mxu0
        %v708 = vpop.f32.mrb[0].mxu0
        %v709 = vadd.f32 0.0, %v708
        %v710 = vpop.f32.mrb[0].mxu0
        %711 = vmatprep.mubr.bf16.mxu0 0
        %712 = vmatmul.mubr.bf16.gmra.mrb[0].mxu0 %v310
        %v713 = vpop.f32.mrb[0].mxu0
        %v714 = vadd.f32 0.0, %v713
        %v715 = vpop.f32.mrb[0].mxu0
        %v716 = vpop.f32.mrb[0].mxu0
        %v717 = vadd.f32 0.0, %v716
        %v718 = vpop.f32.mrb[0].mxu0
        %719 = vmatprep.mubr.bf16.mxu0 0
        %720 = vmatmul.mubr.bf16.gmra.mrb[0].mxu0 %v313
        %v721 = vpop.f32.mrb[0].mxu0
        %v722 = vadd.f32 0.0, %v721
        %v723 = vpop.f32.mrb[0].mxu0
        %v724 = vpop.f32.mrb[0].mxu0
        %v725 = vadd.f32 0.0, %v724
        %v726 = vpop.f32.mrb[0].mxu0
        %727 = vmatprep.mubr.bf16.mxu0 0
        %728 = vmatmul.mubr.bf16.gmra.mrb[0].mxu0 %v316
        %v729 = vpop.f32.mrb[0].mxu0
        %v730 = vadd.f32 0.0, %v729
        %v731 = vpop.f32.mrb[0].mxu0
        %v732 = vpop.f32.mrb[0].mxu0
        %v733 = vadd.f32 0.0, %v732
        %v734 = vpop.f32.mrb[0].mxu0
        %735 = vmatprep.mubr.bf16.mxu0 0
        %736 = vmatmul.mubr.bf16.gmra.mrb[0].mxu0 %v319
        %v737 = vpop.f32.mrb[0].mxu0
        %v738 = vadd.f32 0.0, %v737
        %v739 = vpop.f32.mrb[0].mxu0
        %v740 = vpop.f32.mrb[0].mxu0
        %v741 = vadd.f32 0.0, %v740
        %v742 = vpop.f32.mrb[0].mxu0
        %743 = vmatprep.mubr.bf16.mxu0 0
        %744 = vmatmul.mubr.bf16.gmra.mrb[0].mxu0 %v322
        %v745 = vpop.f32.mrb[0].mxu0
        %v746 = vadd.f32 0.0, %v745
        %v747 = vpop.f32.mrb[0].mxu0
        %v748 = vpop.f32.mrb[0].mxu0
        %v749 = vadd.f32 0.0, %v748
        %v750 = vpop.f32.mrb[0].mxu0
        %751 = vmatprep.mubr.bf16.mxu0 0
        %752 = vmatmul.mubr.bf16.gmra.mrb[0].mxu0 %v325
        %v753 = vpop.f32.mrb[0].mxu0
        %v754 = vadd.f32 0.0, %v753
        %v755 = vpop.f32.mrb[0].mxu0
        %v756 = vpop.f32.mrb[0].mxu0
        %v757 = vadd.f32 0.0, %v756
        %v758 = vpop.f32.mrb[0].mxu0
        %759 = vmatprep.mubr.bf16.mxu0 0
        %760 = vmatmul.mubr.bf16.gmra.mrb[0].mxu0 %v328
        %v761 = vpop.f32.mrb[0].mxu0
        %v762 = vadd.f32 0.0, %v761
        %v763 = vpop.f32.mrb[0].mxu0
        %v764 = vpop.f32.mrb[0].mxu0
        %v765 = vadd.f32 0.0, %v764
        %v766 = vpop.f32.mrb[0].mxu0
        %767 = vdwg.mxu0
        %v768 = vrot.slane %v706, 2
        %v769 = vrot.slane %v709, 2
        %v770 = vrot.slane %v714, 2
        %v771 = vrot.slane %v717, 2
        %v772 = vrot.slane %v722, 2
        %v773 = vrot.slane %v725, 2
        %v774 = vrot.slane %v730, 2
        %v775 = vrot.slane %v733, 2
        %v776 = vrot.slane %v738, 2
        %v777 = vrot.slane %v741, 2
        %v778 = vrot.slane %v746, 2
        %v779 = vrot.slane %v749, 2
        %v780 = vrot.slane %v754, 2
        %v781 = vrot.slane %v757, 2
        %v782 = vrot.slane %v762, 2
        %v783 = vrot.slane %v765, 2
        %vm784 = vcmp.lt.s32.totalorder %v248, 6
        %v785 = vsel %vm784, %v782, %v783
        %v786 = vsel %vm784, %v781, %v782
        %v787 = vsel %vm784, %v780, %v781
        %v788 = vsel %vm784, %v779, %v780
        %v789 = vsel %vm784, %v778, %v779
        %v790 = vsel %vm784, %v777, %v778
        %v791 = vsel %vm784, %v776, %v777
        %v792 = vsel %vm784, %v775, %v776
        %v793 = vsel %vm784, %v774, %v775
        %v794 = vsel %vm784, %v773, %v774
        %v795 = vsel %vm784, %v772, %v773
        %v796 = vsel %vm784, %v771, %v772
        %v797 = vsel %vm784, %v770, %v771
        %v798 = vsel %vm784, %v769, %v770
        %v799 = vsel %vm784, %v768, %v769
        %v800 = vsel %vm784, %v783, %v768
        %v801 = vld [vmem:[#allocation2] sm:$0xff]
        %v802 = vld [vmem:[#allocation2 + $0x8] sm:$0xff]
        %v803 = vld [vmem:[#allocation2 + $0x10] sm:$0xff]
        %v804 = vld [vmem:[#allocation2 + $0x18] sm:$0xff]
        %v805 = vld [vmem:[#allocation2 + $0x20] sm:$0xff]
        %v806 = vld [vmem:[#allocation2 + $0x28] sm:$0xff]
        %v807 = vld [vmem:[#allocation2 + $0x30] sm:$0xff]
        %v808 = vld [vmem:[#allocation2 + $0x38] sm:$0xff]
        %v809 = vld [vmem:[#allocation2 + $0x40] sm:$0xff]
        %v810 = vld [vmem:[#allocation2 + $0x48] sm:$0xff]
        %v811 = vld [vmem:[#allocation2 + $0x50] sm:$0xff]
        %v812 = vld [vmem:[#allocation2 + $0x58] sm:$0xff]
        %v813 = vld [vmem:[#allocation2 + $0x60] sm:$0xff]
        %v814 = vld [vmem:[#allocation2 + $0x68] sm:$0xff]
        %v815 = vld [vmem:[#allocation2 + $0x70] sm:$0xff]
        %v816 = vld [vmem:[#allocation2 + $0x78] sm:$0xff]
        %v817 = vsel %vm784, %v799, 0.0
        %v818 = vsel %vm784, %v798, 0.0
        %v819 = vsel %vm784, %v797, 0.0
        %v820 = vsel %vm784, %v796, 0.0
        %v821 = vsel %vm784, %v795, 0.0
        %v822 = vsel %vm784, %v794, 0.0
        %v823 = vsel %vm784, %v793, 0.0
        %v824 = vsel %vm784, %v792, 0.0
        %v825 = vsel %vm784, %v791, 0.0
        %v826 = vsel %vm784, %v790, 0.0
        %v827 = vsel %vm784, %v789, 0.0
        %v828 = vsel %vm784, %v788, 0.0
        %v829 = vsel %vm784, %v787, 0.0
        %v830 = vsel %vm784, %v786, 0.0
        %v831 = vsel %vm784, %v785, 0.0
        %v832 = vsel %vm784, %v800, 0.0
        %v833 = vadd.f32 %v801, %v817
        %v834 = vadd.f32 %v802, %v818
        %v835 = vadd.f32 %v803, %v819
        %v836 = vadd.f32 %v804, %v820
        %v837 = vadd.f32 %v805, %v821
        %v838 = vadd.f32 %v806, %v822
        %v839 = vadd.f32 %v807, %v823
        %v840 = vadd.f32 %v808, %v824
        %v841 = vadd.f32 %v809, %v825
        %v842 = vadd.f32 %v810, %v826
        %v843 = vadd.f32 %v811, %v827
        %v844 = vadd.f32 %v812, %v828
        %v845 = vadd.f32 %v813, %v829
        %v846 = vadd.f32 %v814, %v830
        %v847 = vadd.f32 %v815, %v831
        %v848 = vadd.f32 %v816, %v832
        %849 = vst [vmem:[#allocation2] sm:$0xff] %v833
        %850 = vst [vmem:[#allocation2 + $0x8] sm:$0xff] %v834
        %851 = vst [vmem:[#allocation2 + $0x10] sm:$0xff] %v835
        %852 = vst [vmem:[#allocation2 + $0x18] sm:$0xff] %v836
        %853 = vst [vmem:[#allocation2 + $0x20] sm:$0xff] %v837
        %854 = vst [vmem:[#allocation2 + $0x28] sm:$0xff] %v838
        %855 = vst [vmem:[#allocation2 + $0x30] sm:$0xff] %v839
        %856 = vst [vmem:[#allocation2 + $0x38] sm:$0xff] %v840
        %857 = vst [vmem:[#allocation2 + $0x40] sm:$0xff] %v841
        %858 = vst [vmem:[#allocation2 + $0x48] sm:$0xff] %v842
        %859 = vst [vmem:[#allocation2 + $0x50] sm:$0xff] %v843
        %860 = vst [vmem:[#allocation2 + $0x58] sm:$0xff] %v844
        %861 = vst [vmem:[#allocation2 + $0x60] sm:$0xff] %v845
        %862 = vst [vmem:[#allocation2 + $0x68] sm:$0xff] %v846
        %863 = vst [vmem:[#allocation2 + $0x70] sm:$0xff] %v847
        %864 = vst [vmem:[#allocation2 + $0x78] sm:$0xff] %v848
        %v865 = vld [vmem:[#allocation2] sm:$0xff]
        %v866 = vld [vmem:[#allocation2 + $0x8] sm:$0xff]
        %v867 = vld [vmem:[#allocation2 + $0x10] sm:$0xff]
        %v868 = vld [vmem:[#allocation2 + $0x18] sm:$0xff]
        %v869 = vld [vmem:[#allocation2 + $0x20] sm:$0xff]
        %v870 = vld [vmem:[#allocation2 + $0x28] sm:$0xff]
        %v871 = vld [vmem:[#allocation2 + $0x30] sm:$0xff]
        %v872 = vld [vmem:[#allocation2 + $0x38] sm:$0xff]
        %v873 = vld [vmem:[#allocation2 + $0x40] sm:$0xff]
        %v874 = vld [vmem:[#allocation2 + $0x48] sm:$0xff]
        %v875 = vld [vmem:[#allocation2 + $0x50] sm:$0xff]
        %v876 = vld [vmem:[#allocation2 + $0x58] sm:$0xff]
        %v877 = vld [vmem:[#allocation2 + $0x60] sm:$0xff]
        %v878 = vld [vmem:[#allocation2 + $0x68] sm:$0xff]
        %v879 = vld [vmem:[#allocation2 + $0x70] sm:$0xff]
        %v880 = vld [vmem:[#allocation2 + $0x78] sm:$0xff]
        %v881 = vrot.slane %v865, 4
        %v882 = vmax.f32 %v865, %v881
        %v883 = vrot.slane %v882, 2
        %v884 = vmax.f32 %v882, %v883
        %v885 = vrot.slane %v884, 1
        %v886 = vmax.f32 %v884, %v885
        %v887 = vrot.slane %v866, 4
        %v888 = vmax.f32 %v866, %v887
        %v889 = vrot.slane %v888, 2
        %v890 = vmax.f32 %v888, %v889
        %v891 = vrot.slane %v890, 1
        %v892 = vmax.f32 %v890, %v891
        %v893 = vrot.slane %v867, 4
        %v894 = vmax.f32 %v867, %v893
        %v895 = vrot.slane %v894, 2
        %v896 = vmax.f32 %v894, %v895
        %v897 = vrot.slane %v896, 1
        %v898 = vmax.f32 %v896, %v897
        %v899 = vrot.slane %v868, 4
        %v900 = vmax.f32 %v868, %v899
        %v901 = vrot.slane %v900, 2
        %v902 = vmax.f32 %v900, %v901
        %v903 = vrot.slane %v902, 1
        %v904 = vmax.f32 %v902, %v903
        %v905 = vrot.slane %v869, 4
        %v906 = vmax.f32 %v869, %v905
        %v907 = vrot.slane %v906, 2
        %v908 = vmax.f32 %v906, %v907
        %v909 = vrot.slane %v908, 1
        %v910 = vmax.f32 %v908, %v909
        %v911 = vrot.slane %v870, 4
        %v912 = vmax.f32 %v870, %v911
        %v913 = vrot.slane %v912, 2
        %v914 = vmax.f32 %v912, %v913
        %v915 = vrot.slane %v914, 1
        %v916 = vmax.f32 %v914, %v915
        %v917 = vrot.slane %v871, 4
        %v918 = vmax.f32 %v871, %v917
        %v919 = vrot.slane %v918, 2
        %v920 = vmax.f32 %v918, %v919
        %v921 = vrot.slane %v920, 1
        %v922 = vmax.f32 %v920, %v921
        %v923 = vrot.slane %v872, 4
        %v924 = vmax.f32 %v872, %v923
        %v925 = vrot.slane %v924, 2
        %v926 = vmax.f32 %v924, %v925
        %v927 = vrot.slane %v926, 1
        %v928 = vmax.f32 %v926, %v927
        %v929 = vrot.slane %v873, 4
        %v930 = vmax.f32 %v873, %v929
        %v931 = vrot.slane %v930, 2
        %v932 = vmax.f32 %v930, %v931
        %v933 = vrot.slane %v932, 1
        %v934 = vmax.f32 %v932, %v933
        %v935 = vrot.slane %v874, 4
        %v936 = vmax.f32 %v874, %v935
        %v937 = vrot.slane %v936, 2
        %v938 = vmax.f32 %v936, %v937
        %v939 = vrot.slane %v938, 1
        %v940 = vmax.f32 %v938, %v939
        %v941 = vrot.slane %v875, 4
        %v942 = vmax.f32 %v875, %v941
        %v943 = vrot.slane %v942, 2
        %v944 = vmax.f32 %v942, %v943
        %v945 = vrot.slane %v944, 1
        %v946 = vmax.f32 %v944, %v945
        %v947 = vrot.slane %v876, 4
        %v948 = vmax.f32 %v876, %v947
        %v949 = vrot.slane %v948, 2
        %v950 = vmax.f32 %v948, %v949
        %v951 = vrot.slane %v950, 1
        %v952 = vmax.f32 %v950, %v951
        %v953 = vrot.slane %v877, 4
        %v954 = vmax.f32 %v877, %v953
        %v955 = vrot.slane %v954, 2
        %v956 = vmax.f32 %v954, %v955
        %v957 = vrot.slane %v956, 1
        %v958 = vmax.f32 %v956, %v957
        %v959 = vrot.slane %v878, 4
        %v960 = vmax.f32 %v878, %v959
        %v961 = vrot.slane %v960, 2
        %v962 = vmax.f32 %v960, %v961
        %v963 = vrot.slane %v962, 1
        %v964 = vmax.f32 %v962, %v963
        %v965 = vrot.slane %v879, 4
        %v966 = vmax.f32 %v879, %v965
        %v967 = vrot.slane %v966, 2
        %v968 = vmax.f32 %v966, %v967
        %v969 = vrot.slane %v968, 1
        %v970 = vmax.f32 %v968, %v969
        %v971 = vrot.slane %v880, 4
        %v972 = vmax.f32 %v880, %v971
        %v973 = vrot.slane %v972, 2
        %v974 = vmax.f32 %v972, %v973
        %v975 = vrot.slane %v974, 1
        %v976 = vmax.f32 %v974, %v975
        %v977 = vld [vmem:[%s2] sm:$0x1]
        %v979 = vlaneseq
        %v980 = vshrl.u32 %v979, 7
        %v981 = vsub.s32 0, %v980
        %v982 = vrot.slane %v977, %v981
        %v984 = vmul.f32 %v886, %v982
        %v985 = vmul.f32 %v892, %v982
        %v986 = vmul.f32 %v898, %v982
        %v987 = vmul.f32 %v904, %v982
        %v988 = vmul.f32 %v910, %v982
        %v989 = vmul.f32 %v916, %v982
        %v990 = vmul.f32 %v922, %v982
        %v991 = vmul.f32 %v928, %v982
        %v992 = vmul.f32 %v934, %v982
        %v993 = vmul.f32 %v940, %v982
        %v994 = vmul.f32 %v946, %v982
        %v995 = vmul.f32 %v952, %v982
        %v996 = vmul.f32 %v958, %v982
        %v997 = vmul.f32 %v964, %v982
        %v998 = vmul.f32 %v970, %v982
        %v999 = vmul.f32 %v976, %v982
        %v1016 = vrot.slane %v985, 7
        %vm1017 = vcmask 1041409
        %v1018 = vsel %vm1017, %v1016, %v984
        %v1019 = vrot.slane %v986, 6
        %vm1020 = vcmask 1042434
        %v1021 = vsel %vm1020, %v1019, %v1018
        %v1022 = vrot.slane %v987, 5
        %vm1023 = vcmask 1043459
        %v1024 = vsel %vm1023, %v1022, %v1021
        %v1025 = vrot.slane %v988, 4
        %vm1026 = vcmask 1044484
        %v1027 = vsel %vm1026, %v1025, %v1024
        %v1028 = vrot.slane %v989, 3
        %vm1029 = vcmask 1045509
        %v1030 = vsel %vm1029, %v1028, %v1027
        %v1031 = vrot.slane %v990, 2
        %vm1032 = vcmask 1046534
        %v1033 = vsel %vm1032, %v1031, %v1030
        %v1034 = vrot.slane %v991, 1
        %vm1035 = vcmask 1047559
        %v1036 = vsel %vm1035, %v1034, %v1033
        %v1037 = vrot.slane %v993, 7
        %v1038 = vsel %vm1017, %v1037, %v992
        %v1039 = vrot.slane %v994, 6
        %v1040 = vsel %vm1020, %v1039, %v1038
        %v1041 = vrot.slane %v995, 5
        %v1042 = vsel %vm1023, %v1041, %v1040
        %v1043 = vrot.slane %v996, 4
        %v1044 = vsel %vm1026, %v1043, %v1042
        %v1045 = vrot.slane %v997, 3
        %v1046 = vsel %vm1029, %v1045, %v1044
        %v1047 = vrot.slane %v998, 2
        %v1048 = vsel %vm1032, %v1047, %v1046
        %v1049 = vrot.slane %v999, 1
        %v1050 = vsel %vm1035, %v1049, %v1048
        %1053 = vadd.xlane.f32.xlu0 %v1036
        %v1054 = vpop.xlane.xlu0 %1053
        %1055 = vadd.xlane.f32.xlu0 %v1050
        %v1056 = vpop.xlane.xlu0 %1055
        %1057 = vst [vmem:[%s228] sm:$0xff] %v1054
        %1058 = vst [vmem:[%s228 + $0x8] sm:$0xff] %v1056
        %s1059 = sand.u32 %s97, 1
        %s1060 = scalar_lea.sflag [#allocation5], %s1059
        %s1061 = sand.u32 %s97, 1
        %s1062 = smul.addr %s1061, 16
        %s1063 = scalar_lea.vmem [#allocation8], %s1062
        // Predicated region
        $region41: #{tpu_custom_call.1} parent=31 // pred_check
          %p1064 = pneg %p107
        $region42: #{tpu_custom_call.1} parent=31 // pred_check_branch
          %1066 = sbr.rel (%p1064) target = $region44
        $region43: #{tpu_custom_call.1} parent=31 // pred_region
          %s1068 = ssub.s32 256, 256
          %1069 = vsyncadd %s1060, %s1068
          %s1070 = smul.addr %s21, 128
          %s1071 = scalar_lea.hbm %s3, %s1070
          %s1072 = sshll.u32 %s1063, 4
          %s1073 = int_to_ptr.vmem [resolvable:$true] %s1072
          %1078 = dma.vmem_to_hbm [thread:$0]  %s1073, 256, %s1071, %s1060, 128, 256, 8
        $region44: #{tpu_custom_call.1} parent=31 // pred_fallthru
          _
      $region32: #{tpu_custom_call.1} parent=5 // pred_fallthru
        _
      %p1079 = scmp.le.s32.totalorder 2, %s16
      // Predicated region
      $region45: #{tpu_custom_call.1} parent=5 // pred_check
        %p1080 = pneg %p1079
      $region46: #{tpu_custom_call.1} parent=5 // pred_check_branch
        %1082 = sbr.rel (%p1080) target = $region48
      $region47: #{tpu_custom_call.1} parent=5 // pred_region
        %s1083 = ssub.s32 %s16, 2
        // Predicated region
        $region49: #{tpu_custom_call.1} parent=47 // pred_check
          %p1084 = pneg %p113
        $region50: #{tpu_custom_call.1} parent=47 // pred_check_branch
          %1086 = sbr.rel (%p1084) target = $region52
        $region51: #{tpu_custom_call.1} parent=47 // pred_region
          %s1087 = sand.u32 %s98, 1
          %s1088 = scalar_lea.sflag [#allocation5], %s1087
          %s1089 = sand.u32 %s98, 1
          %s1090 = smul.addr %s1089, 16
          %s1091 = scalar_lea.vmem [#allocation8], %s1090
          %1092 = dma.done %s1088, 256
        $region52: #{tpu_custom_call.1} parent=47 // pred_fallthru
          _
      $region48: #{tpu_custom_call.1} parent=5 // pred_fallthru
        _
    $region6: #{tpu_custom_call.1} parent=1 // loop_footer
      %s20 = sadd.s32 1, %s16
    $region7: #{tpu_custom_call.1} parent=1 // loop_footer_branch
      %15 = sbr.rel target = $region3
    $region8: #{tpu_custom_call.1} parent=1 // loop_exit
      _
    %1093 = vsyncpa [#allocation4], 1
    %s1094 = scalar_lea.sflag [#allocation4], 1
    %1095 = vsyncpa %s1094, 1
    %1096 = vsyncpa [#allocation7], 1
    %1097 = vsyncpa [#allocation5], 1
    %s1098 = scalar_lea.sflag [#allocation5], 1
    %1099 = vsyncpa %s1098, 1

</llo_original>
